<compile_context>
chip_gen: v7x
topology: tpu7x:2x2x1
jax: 0.10.0
libtpu: 0.0.40
codegen_flags: <defaults>
</compile_context>

<pallas_src>
import functools

import jax
import jax.numpy as jnp
from jax.experimental import pallas as pl
from jax.experimental.pallas import tpu as pltpu


def _cdiv(a, b):
    return -(-a // b)


def _round_up(a, m):
    return _cdiv(a, m) * m


def resnet_kernel(x_ref, w0_ref, b0_ref,
                  bn_s_ref, bn_b_ref, w1_ref, b1_ref, w2_ref, b2_ref,
                  hs_ref, hb_ref, wh_ref, bh_ref,
                  out_ref, *, n_blocks):
    """Whole ResNet forward for one batch tile, entirely in VMEM."""
    bf16 = jnp.bfloat16

    # first_layer: Linear(d_in, d_main) -- bf16 MXU inputs, f32 accumulate.
    h = jnp.dot(x_ref[...].astype(bf16), w0_ref[...],
                preferred_element_type=jnp.float32) + b0_ref[...]

    # Residual blocks (statically unrolled; n_blocks is small).
    # TODO(synk): for large n_blocks / d_main (v7x has only 64 MiB VMEM), move
    # the block axis onto the grid ("arbitrary") with h carried in a VMEM
    # scratch accumulator so only one block's weights are resident at a time.
    for i in range(n_blocks):
        z = h * bn_s_ref[i:i + 1, :] + bn_b_ref[i:i + 1, :]          # BatchNorm1d (eval, folded)
        z = jnp.dot(z.astype(bf16), w1_ref[i],
                    preferred_element_type=jnp.float32) + b1_ref[i:i + 1, :]  # linear_first
        z = jnp.maximum(z, 0.0)                                       # ReLU
        # dropout_first / dropout_second: identity in eval mode
        z = jnp.dot(z.astype(bf16), w2_ref[i],
                    preferred_element_type=jnp.float32) + b2_ref[i:i + 1, :]  # linear_second
        h = h + z                                                     # skip connection

    # head: BatchNorm1d -> ReLU -> Linear(d_main, d_out)
    z = jnp.maximum(h * hs_ref[...] + hb_ref[...], 0.0)
    out_ref[...] = (jnp.dot(z.astype(bf16), wh_ref[...],
                            preferred_element_type=jnp.float32)
                    + bh_ref[...]).astype(out_ref.dtype)


def fold_bn(gamma, beta, mean, var, eps=1e-5):
    scale = gamma / jnp.sqrt(var + eps)
    shift = beta - mean * scale
    return scale, shift


def _choose_tile(n, max_tile=256):
    """Batch tile: multiple of 8, <= max_tile, and >= 2 grid steps if possible
    (v7x has 2 TensorCores; a 'parallel' grid axis is sharded across them)."""
    n8 = _round_up(max(n, 8), 8)
    num_tiles = _cdiv(n8, max_tile)
    if num_tiles == 1 and n8 > 8:
        num_tiles = 2
    return _round_up(_cdiv(n8, num_tiles), 8)


def _full_spec(a):
    zeros = (0,) * a.ndim
    return pl.BlockSpec(a.shape, lambda i: zeros)


def resnet_forward(x, params, *, max_tile=256):
    (w0, b0, bn_s, bn_b, w1, b1, w2, b2, hs, hb, wh, bh) = params
    n, d_in = x.shape
    n_blocks, d_main, d_hidden = w1.shape
    d_out = wh.shape[1]

    LANE = 128
    d_in_p = _round_up(d_in, LANE)
    d_main_p = _round_up(d_main, LANE)
    d_hidden_p = _round_up(d_hidden, LANE)
    d_out_p = _round_up(d_out, LANE)

    tile_n = _choose_tile(n, max_tile)
    grid_n = _cdiv(n, tile_n)
    n_pad = grid_n * tile_n

    f32, bf16 = jnp.float32, jnp.bfloat16

    def pad(a, shape, dtype):
        a = jnp.pad(a, [(0, s - d) for d, s in zip(a.shape, shape)])
        return a.astype(dtype)

    # Zero-padding to full 128-lane vregs is a mathematical no-op (padded
    # weights/BN scales are zero so padded features stay exactly zero).
    x_p = pad(x, (n_pad, d_in_p), f32)
    w0_p = pad(w0, (d_in_p, d_main_p), bf16)
    b0_p = pad(b0, (1, d_main_p), f32)
    bn_s_p = pad(bn_s, (n_blocks, d_main_p), f32)
    bn_b_p = pad(bn_b, (n_blocks, d_main_p), f32)
    w1_p = pad(w1, (n_blocks, d_main_p, d_hidden_p), bf16)
    b1_p = pad(b1, (n_blocks, d_hidden_p), f32)
    w2_p = pad(w2, (n_blocks, d_hidden_p, d_main_p), bf16)
    b2_p = pad(b2, (n_blocks, d_main_p), f32)
    hs_p = pad(hs, (1, d_main_p), f32)
    hb_p = pad(hb, (1, d_main_p), f32)
    wh_p = pad(wh, (d_main_p, d_out_p), bf16)
    bh_p = pad(bh, (1, d_out_p), f32)

    kernel = functools.partial(resnet_kernel, n_blocks=n_blocks)

    grid_spec = pltpu.PrefetchScalarGridSpec(
        num_scalar_prefetch=0,
        grid=(grid_n,),
        in_specs=[
            pl.BlockSpec((tile_n, d_in_p), lambda i: (i, 0)),   # x (batch-tiled)
            _full_spec(w0_p), _full_spec(b0_p),                 # first layer
            _full_spec(bn_s_p), _full_spec(bn_b_p),             # block BN (folded)
            _full_spec(w1_p), _full_spec(b1_p),                 # linear_first
            _full_spec(w2_p), _full_spec(b2_p),                 # linear_second
            _full_spec(hs_p), _full_spec(hb_p),                 # head BN (folded)
            _full_spec(wh_p), _full_spec(bh_p),                 # head linear
        ],
        out_specs=pl.BlockSpec((tile_n, d_out_p), lambda i: (i, 0)),
    )

    out = pl.pallas_call(
        kernel,
        out_shape=jax.ShapeDtypeStruct((n_pad, d_out_p), jnp.float32),
        grid_spec=grid_spec,
        compiler_params=pltpu.CompilerParams(
            dimension_semantics=("parallel",)),
    )(x_p, w0_p, b0_p, bn_s_p, bn_b_p, w1_p, b1_p, w2_p, b2_p,
      hs_p, hb_p, wh_p, bh_p)

    return out[:n, :d_out]


def resnet_reference(x, params):
    """Pure-JAX reference with identical math (bf16 matmul inputs, f32 accum)."""
    (w0, b0, bn_s, bn_b, w1, b1, w2, b2, hs, hb, wh, bh) = params
    bf = lambda a: a.astype(jnp.bfloat16)
    dot = lambda a, w: jnp.dot(bf(a), bf(w), preferred_element_type=jnp.float32)
    h = dot(x, w0) + b0
    for i in range(w1.shape[0]):
        z = h * bn_s[i] + bn_b[i]
        z = jnp.maximum(dot(z, w1[i]) + b1[i], 0.0)
        z = dot(z, w2[i]) + b2[i]
        h = h + z
    z = jnp.maximum(h * hs + hb, 0.0)
    return dot(z, wh) + bh


def make_params(key, *, d_in, n_blocks, d_main, d_hidden, d_out):
    ks = iter(jax.random.split(key, 32))
    nrm = lambda shape, s=0.1: (s * jax.random.normal(next(ks), shape)).astype(jnp.float32)

    w0 = nrm((d_in, d_main));          b0 = nrm((1, d_main))
    # per-block BatchNorm1d (eval mode, folded into scale/shift), dense 2D layout
    gamma = 1.0 + nrm((n_blocks, d_main))
    beta = nrm((n_blocks, d_main))
    mean = nrm((n_blocks, d_main))
    var = 1.0 + 0.5 * jax.random.uniform(next(ks), (n_blocks, d_main), dtype=jnp.float32)
    bn_s, bn_b = fold_bn(gamma, beta, mean, var)
    w1 = nrm((n_blocks, d_main, d_hidden)); b1 = nrm((n_blocks, d_hidden))
    w2 = nrm((n_blocks, d_hidden, d_main)); b2 = nrm((n_blocks, d_main))
    # head BatchNorm1d
    hg = 1.0 + nrm((1, d_main)); hbeta = nrm((1, d_main))
    hm = nrm((1, d_main)); hv = 1.0 + 0.5 * jax.random.uniform(next(ks), (1, d_main), dtype=jnp.float32)
    hs, hb = fold_bn(hg, hbeta, hm, hv)
    wh = nrm((d_main, d_out));          bh = nrm((1, d_out))
    return (w0, b0, bn_s, bn_b, w1, b1, w2, b2, hs, hb, wh, bh)


if __name__ == "__main__":
    # Small, module-consistent shapes.
    batch, d_in, n_blocks, d_main, d_hidden, d_out = 16, 16, 2, 32, 64, 4

    key = jax.random.PRNGKey(0)
    kx, kp = jax.random.split(key)
    x = jax.random.normal(kx, (batch, d_in), dtype=jnp.float32)
    params = make_params(kp, d_in=d_in, n_blocks=n_blocks,
                         d_main=d_main, d_hidden=d_hidden, d_out=d_out)

    out = resnet_forward(x, params)
    out = jax.block_until_ready(out)

    ref = resnet_reference(x, params)
    assert out.shape == (batch, d_out)
    assert jnp.allclose(out, ref, atol=1e-3, rtol=1e-3), "mismatch vs reference"

    print("KERNEL_OK")
</pallas_src>

<mosaic_0001>
module attributes {stable_mosaic.version = 11 : i64} {
  func.func @resnet_kernel(%arg0: i32, %arg1: memref<8x128xf32, #tpu.memory_space<vmem>>, %arg2: memref<128x128xbf16, #tpu.memory_space<vmem>>, %arg3: memref<1x128xf32, #tpu.memory_space<vmem>>, %arg4: memref<2x128xf32, #tpu.memory_space<vmem>>, %arg5: memref<2x128xf32, #tpu.memory_space<vmem>>, %arg6: memref<2x128x128xbf16, #tpu.memory_space<vmem>>, %arg7: memref<2x128xf32, #tpu.memory_space<vmem>>, %arg8: memref<2x128x128xbf16, #tpu.memory_space<vmem>>, %arg9: memref<2x128xf32, #tpu.memory_space<vmem>>, %arg10: memref<1x128xf32, #tpu.memory_space<vmem>>, %arg11: memref<1x128xf32, #tpu.memory_space<vmem>>, %arg12: memref<128x128xbf16, #tpu.memory_space<vmem>>, %arg13: memref<1x128xf32, #tpu.memory_space<vmem>>, %arg14: memref<8x128xf32, #tpu.memory_space<vmem>>) attributes {dimension_semantics = [#tpu.dimension_semantics<parallel>], iteration_bounds = array<i64: 2>, scalar_prefetch = 0 : i64, scratch_operands = 0 : i64, tpu.core_type = #tpu.core_type<tc>, window_params = [{transform_indices = @transform_0, window_bounds = array<i64: 8, 128>}, {pipeline_mode = #tpu.pipeline_mode<synchronous>, transform_indices = @transform_1, window_bounds = array<i64: 128, 128>}, {pipeline_mode = #tpu.pipeline_mode<synchronous>, transform_indices = @transform_2, window_bounds = array<i64: 1, 128>}, {pipeline_mode = #tpu.pipeline_mode<synchronous>, transform_indices = @transform_3, window_bounds = array<i64: 2, 128>}, {pipeline_mode = #tpu.pipeline_mode<synchronous>, transform_indices = @transform_4, window_bounds = array<i64: 2, 128>}, {pipeline_mode = #tpu.pipeline_mode<synchronous>, transform_indices = @transform_5, window_bounds = array<i64: 2, 128, 128>}, {pipeline_mode = #tpu.pipeline_mode<synchronous>, transform_indices = @transform_6, window_bounds = array<i64: 2, 128>}, {pipeline_mode = #tpu.pipeline_mode<synchronous>, transform_indices = @transform_7, window_bounds = array<i64: 2, 128, 128>}, {pipeline_mode = #tpu.pipeline_mode<synchronous>, transform_indices = @transform_8, window_bounds = array<i64: 2, 128>}, {pipeline_mode = #tpu.pipeline_mode<synchronous>, transform_indices = @transform_9, window_bounds = array<i64: 1, 128>}, {pipeline_mode = #tpu.pipeline_mode<synchronous>, transform_indices = @transform_10, window_bounds = array<i64: 1, 128>}, {pipeline_mode = #tpu.pipeline_mode<synchronous>, transform_indices = @transform_11, window_bounds = array<i64: 128, 128>}, {pipeline_mode = #tpu.pipeline_mode<synchronous>, transform_indices = @transform_12, window_bounds = array<i64: 1, 128>}, {transform_indices = @transform_13, window_bounds = array<i64: 8, 128>}]} {
    %c0 = arith.constant 0 : index
    %c0_0 = arith.constant 0 : index
    %0 = vector.load %arg1[%c0, %c0_0] : memref<8x128xf32, #tpu.memory_space<vmem>>, vector<8x128xf32>
    %1 = arith.truncf %0 : vector<8x128xf32> to vector<8x128xbf16>
    %c0_1 = arith.constant 0 : index
    %c0_2 = arith.constant 0 : index
    %2 = vector.load %arg2[%c0_1, %c0_2] : memref<128x128xbf16, #tpu.memory_space<vmem>>, vector<128x128xbf16>
    %cst = arith.constant dense<0.000000e+00> : vector<8x128xf32>
    %3 = tpu.matmul %1, %2, %cst {dimension_numbers = #tpu.dot_dimension_numbers<[1], [0], [0], [1], [0, 0, 1, 1], [], []>} : vector<8x128xbf16>, vector<128x128xbf16>, vector<8x128xf32> -> vector<8x128xf32>
    %c0_3 = arith.constant 0 : index
    %c0_4 = arith.constant 0 : index
    %4 = vector.load %arg3[%c0_3, %c0_4] : memref<1x128xf32, #tpu.memory_space<vmem>>, vector<1x128xf32>
    %5 = vector.broadcast %4 : vector<1x128xf32> to vector<8x128xf32>
    %6 = arith.addf %3, %5 : vector<8x128xf32>
    %c0_5 = arith.constant 0 : index
    %c0_6 = arith.constant 0 : index
    %7 = vector.load %arg4[%c0_5, %c0_6] : memref<2x128xf32, #tpu.memory_space<vmem>>, vector<1x128xf32>
    %8 = vector.broadcast %7 : vector<1x128xf32> to vector<8x128xf32>
    %9 = arith.mulf %6, %8 : vector<8x128xf32>
    %c0_7 = arith.constant 0 : index
    %c0_8 = arith.constant 0 : index
    %10 = vector.load %arg5[%c0_7, %c0_8] : memref<2x128xf32, #tpu.memory_space<vmem>>, vector<1x128xf32>
    %11 = vector.broadcast %10 : vector<1x128xf32> to vector<8x128xf32>
    %12 = arith.addf %9, %11 : vector<8x128xf32>
    %13 = arith.truncf %12 : vector<8x128xf32> to vector<8x128xbf16>
    %c0_9 = arith.constant 0 : index
    %c0_10 = arith.constant 0 : index
    %c0_11 = arith.constant 0 : index
    %14 = vector.load %arg6[%c0_9, %c0_10, %c0_11] : memref<2x128x128xbf16, #tpu.memory_space<vmem>>, vector<1x128x128xbf16>
    %15 = vector.shape_cast %14 : vector<1x128x128xbf16> to vector<128x128xbf16>
    %cst_12 = arith.constant dense<0.000000e+00> : vector<8x128xf32>
    %16 = tpu.matmul %13, %15, %cst_12 {dimension_numbers = #tpu.dot_dimension_numbers<[1], [0], [0], [1], [0, 0, 1, 1], [], []>} : vector<8x128xbf16>, vector<128x128xbf16>, vector<8x128xf32> -> vector<8x128xf32>
    %c0_13 = arith.constant 0 : index
    %c0_14 = arith.constant 0 : index
    %17 = vector.load %arg7[%c0_13, %c0_14] : memref<2x128xf32, #tpu.memory_space<vmem>>, vector<1x128xf32>
    %18 = vector.broadcast %17 : vector<1x128xf32> to vector<8x128xf32>
    %19 = arith.addf %16, %18 : vector<8x128xf32>
    %cst_15 = arith.constant 0.000000e+00 : f32
    %20 = vector.broadcast %cst_15 : f32 to vector<8x128xf32>
    %21 = arith.maximumf %19, %20 : vector<8x128xf32>
    %22 = arith.truncf %21 : vector<8x128xf32> to vector<8x128xbf16>
    %c0_16 = arith.constant 0 : index
    %c0_17 = arith.constant 0 : index
    %c0_18 = arith.constant 0 : index
    %23 = vector.load %arg8[%c0_16, %c0_17, %c0_18] : memref<2x128x128xbf16, #tpu.memory_space<vmem>>, vector<1x128x128xbf16>
    %24 = vector.shape_cast %23 : vector<1x128x128xbf16> to vector<128x128xbf16>
    %cst_19 = arith.constant dense<0.000000e+00> : vector<8x128xf32>
    %25 = tpu.matmul %22, %24, %cst_19 {dimension_numbers = #tpu.dot_dimension_numbers<[1], [0], [0], [1], [0, 0, 1, 1], [], []>} : vector<8x128xbf16>, vector<128x128xbf16>, vector<8x128xf32> -> vector<8x128xf32>
    %c0_20 = arith.constant 0 : index
    %c0_21 = arith.constant 0 : index
    %26 = vector.load %arg9[%c0_20, %c0_21] : memref<2x128xf32, #tpu.memory_space<vmem>>, vector<1x128xf32>
    %27 = vector.broadcast %26 : vector<1x128xf32> to vector<8x128xf32>
    %28 = arith.addf %25, %27 : vector<8x128xf32>
    %29 = arith.addf %6, %28 : vector<8x128xf32>
    %c1 = arith.constant 1 : index
    %c0_22 = arith.constant 0 : index
    %30 = vector.load %arg4[%c1, %c0_22] : memref<2x128xf32, #tpu.memory_space<vmem>>, vector<1x128xf32>
    %31 = vector.broadcast %30 : vector<1x128xf32> to vector<8x128xf32>
    %32 = arith.mulf %29, %31 : vector<8x128xf32>
    %c1_23 = arith.constant 1 : index
    %c0_24 = arith.constant 0 : index
    %33 = vector.load %arg5[%c1_23, %c0_24] : memref<2x128xf32, #tpu.memory_space<vmem>>, vector<1x128xf32>
    %34 = vector.broadcast %33 : vector<1x128xf32> to vector<8x128xf32>
    %35 = arith.addf %32, %34 : vector<8x128xf32>
    %36 = arith.truncf %35 : vector<8x128xf32> to vector<8x128xbf16>
    %c1_25 = arith.constant 1 : index
    %c0_26 = arith.constant 0 : index
    %c0_27 = arith.constant 0 : index
    %37 = vector.load %arg6[%c1_25, %c0_26, %c0_27] : memref<2x128x128xbf16, #tpu.memory_space<vmem>>, vector<1x128x128xbf16>
    %38 = vector.shape_cast %37 : vector<1x128x128xbf16> to vector<128x128xbf16>
    %cst_28 = arith.constant dense<0.000000e+00> : vector<8x128xf32>
    %39 = tpu.matmul %36, %38, %cst_28 {dimension_numbers = #tpu.dot_dimension_numbers<[1], [0], [0], [1], [0, 0, 1, 1], [], []>} : vector<8x128xbf16>, vector<128x128xbf16>, vector<8x128xf32> -> vector<8x128xf32>
    %c1_29 = arith.constant 1 : index
    %c0_30 = arith.constant 0 : index
    %40 = vector.load %arg7[%c1_29, %c0_30] : memref<2x128xf32, #tpu.memory_space<vmem>>, vector<1x128xf32>
    %41 = vector.broadcast %40 : vector<1x128xf32> to vector<8x128xf32>
    %42 = arith.addf %39, %41 : vector<8x128xf32>
    %cst_31 = arith.constant 0.000000e+00 : f32
    %43 = vector.broadcast %cst_31 : f32 to vector<8x128xf32>
    %44 = arith.maximumf %42, %43 : vector<8x128xf32>
    %45 = arith.truncf %44 : vector<8x128xf32> to vector<8x128xbf16>
    %c1_32 = arith.constant 1 : index
    %c0_33 = arith.constant 0 : index
    %c0_34 = arith.constant 0 : index
    %46 = vector.load %arg8[%c1_32, %c0_33, %c0_34] : memref<2x128x128xbf16, #tpu.memory_space<vmem>>, vector<1x128x128xbf16>
    %47 = vector.shape_cast %46 : vector<1x128x128xbf16> to vector<128x128xbf16>
    %cst_35 = arith.constant dense<0.000000e+00> : vector<8x128xf32>
    %48 = tpu.matmul %45, %47, %cst_35 {dimension_numbers = #tpu.dot_dimension_numbers<[1], [0], [0], [1], [0, 0, 1, 1], [], []>} : vector<8x128xbf16>, vector<128x128xbf16>, vector<8x128xf32> -> vector<8x128xf32>
    %c1_36 = arith.constant 1 : index
    %c0_37 = arith.constant 0 : index
    %49 = vector.load %arg9[%c1_36, %c0_37] : memref<2x128xf32, #tpu.memory_space<vmem>>, vector<1x128xf32>
    %50 = vector.broadcast %49 : vector<1x128xf32> to vector<8x128xf32>
    %51 = arith.addf %48, %50 : vector<8x128xf32>
    %52 = arith.addf %29, %51 : vector<8x128xf32>
    %c0_38 = arith.constant 0 : index
    %c0_39 = arith.constant 0 : index
    %53 = vector.load %arg10[%c0_38, %c0_39] : memref<1x128xf32, #tpu.memory_space<vmem>>, vector<1x128xf32>
    %54 = vector.broadcast %53 : vector<1x128xf32> to vector<8x128xf32>
    %55 = arith.mulf %52, %54 : vector<8x128xf32>
    %c0_40 = arith.constant 0 : index
    %c0_41 = arith.constant 0 : index
    %56 = vector.load %arg11[%c0_40, %c0_41] : memref<1x128xf32, #tpu.memory_space<vmem>>, vector<1x128xf32>
    %57 = vector.broadcast %56 : vector<1x128xf32> to vector<8x128xf32>
    %58 = arith.addf %55, %57 : vector<8x128xf32>
    %cst_42 = arith.constant 0.000000e+00 : f32
    %59 = vector.broadcast %cst_42 : f32 to vector<8x128xf32>
    %60 = arith.maximumf %58, %59 : vector<8x128xf32>
    %61 = arith.truncf %60 : vector<8x128xf32> to vector<8x128xbf16>
    %c0_43 = arith.constant 0 : index
    %c0_44 = arith.constant 0 : index
    %62 = vector.load %arg12[%c0_43, %c0_44] : memref<128x128xbf16, #tpu.memory_space<vmem>>, vector<128x128xbf16>
    %cst_45 = arith.constant dense<0.000000e+00> : vector<8x128xf32>
    %63 = tpu.matmul %61, %62, %cst_45 {dimension_numbers = #tpu.dot_dimension_numbers<[1], [0], [0], [1], [0, 0, 1, 1], [], []>} : vector<8x128xbf16>, vector<128x128xbf16>, vector<8x128xf32> -> vector<8x128xf32>
    %c0_46 = arith.constant 0 : index
    %c0_47 = arith.constant 0 : index
    %64 = vector.load %arg13[%c0_46, %c0_47] : memref<1x128xf32, #tpu.memory_space<vmem>>, vector<1x128xf32>
    %65 = vector.broadcast %64 : vector<1x128xf32> to vector<8x128xf32>
    %66 = arith.addf %63, %65 : vector<8x128xf32>
    %c0_48 = arith.constant 0 : index
    %c0_49 = arith.constant 0 : index
    %67 = vector.load %arg14[%c0_48, %c0_49] : memref<8x128xf32, #tpu.memory_space<vmem>>, vector<8x128xf32>
    tpu.vector_store %arg14[%c0_48, %c0_49], %66 {strides = array<i32>} : memref<8x128xf32, #tpu.memory_space<vmem>>, vector<8x128xf32>,
    return
  }
  func.func @transform_0(%arg0: i32) -> (i32, i32) {
    %c0_i32 = arith.constant 0 : i32
    %c0_i32_0 = arith.constant 0 : i32
    return %arg0, %c0_i32 : i32, i32
  }
  func.func @transform_1(%arg0: i32) -> (i32, i32) {
    %c0_i32 = arith.constant 0 : i32
    %c0_i32_0 = arith.constant 0 : i32
    %c0_i32_1 = arith.constant 0 : i32
    return %c0_i32, %c0_i32_0 : i32, i32
  }
  func.func @transform_2(%arg0: i32) -> (i32, i32) {
    %c0_i32 = arith.constant 0 : i32
    %c0_i32_0 = arith.constant 0 : i32
    %c0_i32_1 = arith.constant 0 : i32
    return %c0_i32, %c0_i32_0 : i32, i32
  }
  func.func @transform_3(%arg0: i32) -> (i32, i32) {
    %c0_i32 = arith.constant 0 : i32
    %c0_i32_0 = arith.constant 0 : i32
    %c0_i32_1 = arith.constant 0 : i32
    return %c0_i32, %c0_i32_0 : i32, i32
  }
  func.func @transform_4(%arg0: i32) -> (i32, i32) {
    %c0_i32 = arith.constant 0 : i32
    %c0_i32_0 = arith.constant 0 : i32
    %c0_i32_1 = arith.constant 0 : i32
    return %c0_i32, %c0_i32_0 : i32, i32
  }
  func.func @transform_5(%arg0: i32) -> (i32, i32, i32) {
    %c0_i32 = arith.constant 0 : i32
    %c0_i32_0 = arith.constant 0 : i32
    %c0_i32_1 = arith.constant 0 : i32
    %c0_i32_2 = arith.constant 0 : i32
    return %c0_i32, %c0_i32_0, %c0_i32_1 : i32, i32, i32
  }
  func.func @transform_6(%arg0: i32) -> (i32, i32) {
    %c0_i32 = arith.constant 0 : i32
    %c0_i32_0 = arith.constant 0 : i32
    %c0_i32_1 = arith.constant 0 : i32
    return %c0_i32, %c0_i32_0 : i32, i32
  }
  func.func @transform_7(%arg0: i32) -> (i32, i32, i32) {
    %c0_i32 = arith.constant 0 : i32
    %c0_i32_0 = arith.constant 0 : i32
    %c0_i32_1 = arith.constant 0 : i32
    %c0_i32_2 = arith.constant 0 : i32
    return %c0_i32, %c0_i32_0, %c0_i32_1 : i32, i32, i32
  }
  func.func @transform_8(%arg0: i32) -> (i32, i32) {
    %c0_i32 = arith.constant 0 : i32
    %c0_i32_0 = arith.constant 0 : i32
    %c0_i32_1 = arith.constant 0 : i32
    return %c0_i32, %c0_i32_0 : i32, i32
  }
  func.func @transform_9(%arg0: i32) -> (i32, i32) {
    %c0_i32 = arith.constant 0 : i32
    %c0_i32_0 = arith.constant 0 : i32
    %c0_i32_1 = arith.constant 0 : i32
    return %c0_i32, %c0_i32_0 : i32, i32
  }
  func.func @transform_10(%arg0: i32) -> (i32, i32) {
    %c0_i32 = arith.constant 0 : i32
    %c0_i32_0 = arith.constant 0 : i32
    %c0_i32_1 = arith.constant 0 : i32
    return %c0_i32, %c0_i32_0 : i32, i32
  }
  func.func @transform_11(%arg0: i32) -> (i32, i32) {
    %c0_i32 = arith.constant 0 : i32
    %c0_i32_0 = arith.constant 0 : i32
    %c0_i32_1 = arith.constant 0 : i32
    return %c0_i32, %c0_i32_0 : i32, i32
  }
  func.func @transform_12(%arg0: i32) -> (i32, i32) {
    %c0_i32 = arith.constant 0 : i32
    %c0_i32_0 = arith.constant 0 : i32
    %c0_i32_1 = arith.constant 0 : i32
    return %c0_i32, %c0_i32_0 : i32, i32
  }
  func.func @transform_13(%arg0: i32) -> (i32, i32) {
    %c0_i32 = arith.constant 0 : i32
    %c0_i32_0 = arith.constant 0 : i32
    return %arg0, %c0_i32 : i32, i32
  }
}

</mosaic_0001>

<llo_original>
// kernel: tpu_custom_call.1
$region0: #{tpu_custom_call.1}
  #allocation0 [shape = 'u32[]', space=smem, size = 0x4, offset = 0x4, fixed_abs, tag = 'smem constant byte address 0x4 - core index']
  #allocation1 [shape = 'u32[144,128]{1,0:T(1,128)}', space=vmem, size = 0x12000, scoped, tag = 'internal scratch']
  %s0 = inlined_call_operand.hbm [shape: f32[16,128], index: 0, kind: input, shape index: {}]
  %s1 = inlined_call_operand.hbm [shape: bf16[128,128], index: 1, kind: input, shape index: {}]
  %s2 = inlined_call_operand.vmem [shape: f32[1,128], index: 2, kind: input, shape index: {}]
  %s3 = inlined_call_operand.vmem [shape: f32[2,128], index: 3, kind: input, shape index: {}]
  %s4 = inlined_call_operand.vmem [shape: f32[2,128], index: 4, kind: input, shape index: {}]
  %s5 = inlined_call_operand.hbm [shape: bf16[2,128,128], index: 5, kind: input, shape index: {}]
  %s6 = inlined_call_operand.vmem [shape: f32[2,128], index: 6, kind: input, shape index: {}]
  %s7 = inlined_call_operand.hbm [shape: bf16[2,128,128], index: 7, kind: input, shape index: {}]
  %s8 = inlined_call_operand.vmem [shape: f32[2,128], index: 8, kind: input, shape index: {}]
  %s9 = inlined_call_operand.vmem [shape: f32[1,128], index: 9, kind: input, shape index: {}]
  %s10 = inlined_call_operand.vmem [shape: f32[1,128], index: 10, kind: input, shape index: {}]
  %s11 = inlined_call_operand.hbm [shape: bf16[128,128], index: 11, kind: input, shape index: {}]
  %s12 = inlined_call_operand.vmem [shape: f32[1,128], index: 12, kind: input, shape index: {}]
  %s13 = inlined_call_operand.hbm [shape: f32[16,128], index: 13, kind: output, shape index: {}]
  %s14 = sld [smem:[#allocation0]]
  $region105: #{tpu_custom_call.1} parent=0
    _
  %s16 = ssub.s32 1, %s14
  %s17 = scalar_select 0, %s16, %s14
  $region1: #{tpu_custom_call.1} parent=0
    #allocation2 [shape = 'u8[8192]{0}', space=vmem, size = 0x2000, scoped, tag = 'input window, operand 0']
    #allocation3 [shape = 's32[2]{0}', space=sflag, size = 0x8, scoped, tag = 'scoped memory for tpu_custom_call.1']
    #allocation4 [shape = 's32[2]{0}', space=sflag, size = 0x8, scoped, tag = 'scoped memory for tpu_custom_call.1']
    #allocation5 [shape = 'u8[32768]{0}', space=vmem, size = 0x8000, scoped, tag = 'input window, operand 1, single buffered']
    #allocation6 [shape = 's32[1]{0}', space=sflag, size = 0x4, scoped, tag = 'scoped memory for tpu_custom_call.1']
    #allocation7 [shape = 'u8[65536]{0}', space=vmem, size = 0x10000, scoped, tag = 'input window, operand 5, single buffered']
    #allocation8 [shape = 'u8[65536]{0}', space=vmem, size = 0x10000, scoped, tag = 'input window, operand 7, single buffered']
    #allocation9 [shape = 's32[1]{0}', space=sflag, size = 0x4, scoped, tag = 'scoped memory for tpu_custom_call.1']
    #allocation10 [shape = 'u8[32768]{0}', space=vmem, size = 0x8000, scoped, tag = 'input window, operand 11, single buffered']
    #allocation11 [shape = 'u8[8192]{0}', space=vmem, size = 0x2000, scoped, tag = 'output window, operand 0']
    %18 = vsyncpa [#allocation3], 0
    %s19 = scalar_lea.sflag [#allocation3], 1
    %20 = vsyncpa %s19, 0
    %21 = vsyncpa [#allocation6], 0
    %22 = vsyncpa [#allocation9], 0
    %23 = vsyncpa [#allocation4], 0
    %s24 = scalar_lea.sflag [#allocation4], 1
    %25 = vsyncpa %s24, 0
    loop: start=0, step=1, limit=4
    $region2: #{tpu_custom_call.1} parent=1 // loop_pre_header
      _
    $region3: #{tpu_custom_call.1} parent=1 // loop_header
      %s27 = sphi 0, %s31
      %p28 = scmp.ge.s32.totalorder %s27, 4
      %s37 = sphi 0, %s39
      %s40 = sphi 0, %s37
      %s41 = sphi 0, %s40
      %s57 = sphi 0, %s41
      %s61 = sphi 0, %s61
      %s63 = sphi 0, %s61
      %s64 = sphi 0, %s63
      %s78 = sphi 0, %s64
      %s82 = sphi 0, %s82
      %s84 = sphi 0, %s82
      %s85 = sphi 0, %s84
      %s99 = sphi 0, %s85
      %s103 = sphi 0, %s103
      %s105 = sphi 0, %s103
      %s106 = sphi 0, %s105
      %s120 = sphi 0, %s106
      %s124 = sphi 0, %s124
      %s126 = sphi 0, %s124
      %s127 = sphi 0, %s126
      %s141 = sphi 0, %s127
      %s145 = sphi 0, %s145
      %s147 = sphi 0, %s145
      %s148 = sphi 0, %s147
      %s162 = sphi 0, %s148
      %s166 = sphi 0, %s166
      %s168 = sphi 0, %s166
      %s169 = sphi 0, %s168
      %s183 = sphi 0, %s169
      %s187 = sphi 0, %s187
      %s189 = sphi 0, %s187
      %s190 = sphi 0, %s189
      %s204 = sphi 0, %s190
      %s208 = sphi 0, %s208
      %s210 = sphi 0, %s208
      %s211 = sphi 0, %s210
      %s225 = sphi 0, %s211
      %s229 = sphi 0, %s229
      %s231 = sphi 0, %s229
      %s232 = sphi 0, %s231
      %s246 = sphi 0, %s232
      %s250 = sphi 0, %s250
      %s252 = sphi 0, %s250
      %s253 = sphi 0, %s252
      %s267 = sphi 0, %s253
      %s271 = sphi 0, %s271
      %s273 = sphi 0, %s271
      %s274 = sphi 0, %s273
      %s288 = sphi 0, %s274
      %s292 = sphi 0, %s292
      %s294 = sphi 0, %s292
      %s295 = sphi 0, %s294
      %s309 = sphi 0, %s295
      %s315 = sphi 0, %s317
      %s318 = sphi 0, %s315
      %s319 = sphi 0, %s318
      %s335 = sphi 0, %s319
    $region4: #{tpu_custom_call.1} parent=1 // loop_header_branch
      %30 = sbr.rel (%p28) target = $region8
    $region5: #{tpu_custom_call.1} parent=1 // loop_body
      %s32 = ssub.s32 %s27, 1
      %s33 = ssub.s32 %s27, 2
      %s34 = sadd.s32 %s27, 1
      %s35 = ssub.s32 %s27, %s34
      %p36 = scmp.eq.s32.totalorder %s35, 0
      %s38 = sadd.s32 %s37, 1
      %s39 = scalar_select %p36, %s37, %s38
      %p42 = pneg %p36
      %p43 = scmp.eq.s32.totalorder %s27, 1
      %p44 = por %p42, %p43
      %p45 = scmp.ne.s32.totalorder %s37, %s40
      %p46 = scmp.eq.s32.totalorder %s27, 0
      %p47 = por %p45, %p46
      %p48 = scmp.ne.s32.totalorder %s37, %s40
      %p49 = scmp.eq.s32.totalorder %s32, 1
      %p50 = por %p48, %p49
      %p51 = scmp.ne.s32.totalorder %s40, %s41
      %p52 = scmp.eq.s32.totalorder %s32, 0
      %p53 = por %p51, %p52
      %p54 = scmp.ne.s32.totalorder %s40, %s41
      %p55 = scmp.eq.s32.totalorder %s33, 1
      %p56 = por %p54, %p55
      %p58 = scmp.ne.s32.totalorder %s41, %s57
      %p59 = scmp.eq.s32.totalorder %s33, 0
      %p60 = por %p58, %p59
      %s62 = sadd.s32 %s61, 1
      %p65 = scmp.eq.s32.totalorder %s27, 1
      %p66 = scmp.ne.s32.totalorder %s61, %s63
      %p67 = scmp.eq.s32.totalorder %s27, 0
      %p68 = por %p66, %p67
      %p69 = scmp.ne.s32.totalorder %s61, %s63
      %p70 = scmp.eq.s32.totalorder %s32, 1
      %p71 = por %p69, %p70
      %p72 = scmp.ne.s32.totalorder %s63, %s64
      %p73 = scmp.eq.s32.totalorder %s32, 0
      %p74 = por %p72, %p73
      %p75 = scmp.ne.s32.totalorder %s63, %s64
      %p76 = scmp.eq.s32.totalorder %s33, 1
      %p77 = por %p75, %p76
      %p79 = scmp.ne.s32.totalorder %s64, %s78
      %p80 = scmp.eq.s32.totalorder %s33, 0
      %p81 = por %p79, %p80
      %s83 = sadd.s32 %s82, 1
      %p86 = scmp.eq.s32.totalorder %s27, 1
      %p87 = scmp.ne.s32.totalorder %s82, %s84
      %p88 = scmp.eq.s32.totalorder %s27, 0
      %p89 = por %p87, %p88
      %p90 = scmp.ne.s32.totalorder %s82, %s84
      %p91 = scmp.eq.s32.totalorder %s32, 1
      %p92 = por %p90, %p91
      %p93 = scmp.ne.s32.totalorder %s84, %s85
      %p94 = scmp.eq.s32.totalorder %s32, 0
      %p95 = por %p93, %p94
      %p96 = scmp.ne.s32.totalorder %s84, %s85
      %p97 = scmp.eq.s32.totalorder %s33, 1
      %p98 = por %p96, %p97
      %p100 = scmp.ne.s32.totalorder %s85, %s99
      %p101 = scmp.eq.s32.totalorder %s33, 0
      %p102 = por %p100, %p101
      %s104 = sadd.s32 %s103, 1
      %p107 = scmp.eq.s32.totalorder %s27, 1
      %p108 = scmp.ne.s32.totalorder %s103, %s105
      %p109 = scmp.eq.s32.totalorder %s27, 0
      %p110 = por %p108, %p109
      %p111 = scmp.ne.s32.totalorder %s103, %s105
      %p112 = scmp.eq.s32.totalorder %s32, 1
      %p113 = por %p111, %p112
      %p114 = scmp.ne.s32.totalorder %s105, %s106
      %p115 = scmp.eq.s32.totalorder %s32, 0
      %p116 = por %p114, %p115
      %p117 = scmp.ne.s32.totalorder %s105, %s106
      %p118 = scmp.eq.s32.totalorder %s33, 1
      %p119 = por %p117, %p118
      %p121 = scmp.ne.s32.totalorder %s106, %s120
      %p122 = scmp.eq.s32.totalorder %s33, 0
      %p123 = por %p121, %p122
      %s125 = sadd.s32 %s124, 1
      %p128 = scmp.eq.s32.totalorder %s27, 1
      %p129 = scmp.ne.s32.totalorder %s124, %s126
      %p130 = scmp.eq.s32.totalorder %s27, 0
      %p131 = por %p129, %p130
      %p132 = scmp.ne.s32.totalorder %s124, %s126
      %p133 = scmp.eq.s32.totalorder %s32, 1
      %p134 = por %p132, %p133
      %p135 = scmp.ne.s32.totalorder %s126, %s127
      %p136 = scmp.eq.s32.totalorder %s32, 0
      %p137 = por %p135, %p136
      %p138 = scmp.ne.s32.totalorder %s126, %s127
      %p139 = scmp.eq.s32.totalorder %s33, 1
      %p140 = por %p138, %p139
      %p142 = scmp.ne.s32.totalorder %s127, %s141
      %p143 = scmp.eq.s32.totalorder %s33, 0
      %p144 = por %p142, %p143
      %s146 = sadd.s32 %s145, 1
      %p149 = scmp.eq.s32.totalorder %s27, 1
      %p150 = scmp.ne.s32.totalorder %s145, %s147
      %p151 = scmp.eq.s32.totalorder %s27, 0
      %p152 = por %p150, %p151
      %p153 = scmp.ne.s32.totalorder %s145, %s147
      %p154 = scmp.eq.s32.totalorder %s32, 1
      %p155 = por %p153, %p154
      %p156 = scmp.ne.s32.totalorder %s147, %s148
      %p157 = scmp.eq.s32.totalorder %s32, 0
      %p158 = por %p156, %p157
      %p159 = scmp.ne.s32.totalorder %s147, %s148
      %p160 = scmp.eq.s32.totalorder %s33, 1
      %p161 = por %p159, %p160
      %p163 = scmp.ne.s32.totalorder %s148, %s162
      %p164 = scmp.eq.s32.totalorder %s33, 0
      %p165 = por %p163, %p164
      %s167 = sadd.s32 %s166, 1
      %p170 = scmp.eq.s32.totalorder %s27, 1
      %p171 = scmp.ne.s32.totalorder %s166, %s168
      %p172 = scmp.eq.s32.totalorder %s27, 0
      %p173 = por %p171, %p172
      %p174 = scmp.ne.s32.totalorder %s166, %s168
      %p175 = scmp.eq.s32.totalorder %s32, 1
      %p176 = por %p174, %p175
      %p177 = scmp.ne.s32.totalorder %s168, %s169
      %p178 = scmp.eq.s32.totalorder %s32, 0
      %p179 = por %p177, %p178
      %p180 = scmp.ne.s32.totalorder %s168, %s169
      %p181 = scmp.eq.s32.totalorder %s33, 1
      %p182 = por %p180, %p181
      %p184 = scmp.ne.s32.totalorder %s169, %s183
      %p185 = scmp.eq.s32.totalorder %s33, 0
      %p186 = por %p184, %p185
      %s188 = sadd.s32 %s187, 1
      %p191 = scmp.eq.s32.totalorder %s27, 1
      %p192 = scmp.ne.s32.totalorder %s187, %s189
      %p193 = scmp.eq.s32.totalorder %s27, 0
      %p194 = por %p192, %p193
      %p195 = scmp.ne.s32.totalorder %s187, %s189
      %p196 = scmp.eq.s32.totalorder %s32, 1
      %p197 = por %p195, %p196
      %p198 = scmp.ne.s32.totalorder %s189, %s190
      %p199 = scmp.eq.s32.totalorder %s32, 0
      %p200 = por %p198, %p199
      %p201 = scmp.ne.s32.totalorder %s189, %s190
      %p202 = scmp.eq.s32.totalorder %s33, 1
      %p203 = por %p201, %p202
      %p205 = scmp.ne.s32.totalorder %s190, %s204
      %p206 = scmp.eq.s32.totalorder %s33, 0
      %p207 = por %p205, %p206
      %s209 = sadd.s32 %s208, 1
      %p212 = scmp.eq.s32.totalorder %s27, 1
      %p213 = scmp.ne.s32.totalorder %s208, %s210
      %p214 = scmp.eq.s32.totalorder %s27, 0
      %p215 = por %p213, %p214
      %p216 = scmp.ne.s32.totalorder %s208, %s210
      %p217 = scmp.eq.s32.totalorder %s32, 1
      %p218 = por %p216, %p217
      %p219 = scmp.ne.s32.totalorder %s210, %s211
      %p220 = scmp.eq.s32.totalorder %s32, 0
      %p221 = por %p219, %p220
      %p222 = scmp.ne.s32.totalorder %s210, %s211
      %p223 = scmp.eq.s32.totalorder %s33, 1
      %p224 = por %p222, %p223
      %p226 = scmp.ne.s32.totalorder %s211, %s225
      %p227 = scmp.eq.s32.totalorder %s33, 0
      %p228 = por %p226, %p227
      %s230 = sadd.s32 %s229, 1
      %p233 = scmp.eq.s32.totalorder %s27, 1
      %p234 = scmp.ne.s32.totalorder %s229, %s231
      %p235 = scmp.eq.s32.totalorder %s27, 0
      %p236 = por %p234, %p235
      %p237 = scmp.ne.s32.totalorder %s229, %s231
      %p238 = scmp.eq.s32.totalorder %s32, 1
      %p239 = por %p237, %p238
      %p240 = scmp.ne.s32.totalorder %s231, %s232
      %p241 = scmp.eq.s32.totalorder %s32, 0
      %p242 = por %p240, %p241
      %p243 = scmp.ne.s32.totalorder %s231, %s232
      %p244 = scmp.eq.s32.totalorder %s33, 1
      %p245 = por %p243, %p244
      %p247 = scmp.ne.s32.totalorder %s232, %s246
      %p248 = scmp.eq.s32.totalorder %s33, 0
      %p249 = por %p247, %p248
      %s251 = sadd.s32 %s250, 1
      %p254 = scmp.eq.s32.totalorder %s27, 1
      %p255 = scmp.ne.s32.totalorder %s250, %s252
      %p256 = scmp.eq.s32.totalorder %s27, 0
      %p257 = por %p255, %p256
      %p258 = scmp.ne.s32.totalorder %s250, %s252
      %p259 = scmp.eq.s32.totalorder %s32, 1
      %p260 = por %p258, %p259
      %p261 = scmp.ne.s32.totalorder %s252, %s253
      %p262 = scmp.eq.s32.totalorder %s32, 0
      %p263 = por %p261, %p262
      %p264 = scmp.ne.s32.totalorder %s252, %s253
      %p265 = scmp.eq.s32.totalorder %s33, 1
      %p266 = por %p264, %p265
      %p268 = scmp.ne.s32.totalorder %s253, %s267
      %p269 = scmp.eq.s32.totalorder %s33, 0
      %p270 = por %p268, %p269
      %s272 = sadd.s32 %s271, 1
      %p275 = scmp.eq.s32.totalorder %s27, 1
      %p276 = scmp.ne.s32.totalorder %s271, %s273
      %p277 = scmp.eq.s32.totalorder %s27, 0
      %p278 = por %p276, %p277
      %p279 = scmp.ne.s32.totalorder %s271, %s273
      %p280 = scmp.eq.s32.totalorder %s32, 1
      %p281 = por %p279, %p280
      %p282 = scmp.ne.s32.totalorder %s273, %s274
      %p283 = scmp.eq.s32.totalorder %s32, 0
      %p284 = por %p282, %p283
      %p285 = scmp.ne.s32.totalorder %s273, %s274
      %p286 = scmp.eq.s32.totalorder %s33, 1
      %p287 = por %p285, %p286
      %p289 = scmp.ne.s32.totalorder %s274, %s288
      %p290 = scmp.eq.s32.totalorder %s33, 0
      %p291 = por %p289, %p290
      %s293 = sadd.s32 %s292, 1
      %p296 = scmp.eq.s32.totalorder %s27, 1
      %p297 = scmp.ne.s32.totalorder %s292, %s294
      %p298 = scmp.eq.s32.totalorder %s27, 0
      %p299 = por %p297, %p298
      %p300 = scmp.ne.s32.totalorder %s292, %s294
      %p301 = scmp.eq.s32.totalorder %s32, 1
      %p302 = por %p300, %p301
      %p303 = scmp.ne.s32.totalorder %s294, %s295
      %p304 = scmp.eq.s32.totalorder %s32, 0
      %p305 = por %p303, %p304
      %p306 = scmp.ne.s32.totalorder %s294, %s295
      %p307 = scmp.eq.s32.totalorder %s33, 1
      %p308 = por %p306, %p307
      %p310 = scmp.ne.s32.totalorder %s295, %s309
      %p311 = scmp.eq.s32.totalorder %s33, 0
      %p312 = por %p310, %p311
      %s313 = ssub.s32 %s27, %s34
      %p314 = scmp.eq.s32.totalorder %s313, 0
      %s316 = sadd.s32 %s315, 1
      %s317 = scalar_select %p314, %s315, %s316
      %p320 = pneg %p314
      %p321 = scmp.eq.s32.totalorder %s27, 1
      %p322 = por %p320, %p321
      %p323 = scmp.ne.s32.totalorder %s315, %s318
      %p324 = scmp.eq.s32.totalorder %s27, 0
      %p325 = por %p323, %p324
      %p326 = scmp.ne.s32.totalorder %s315, %s318
      %p327 = scmp.eq.s32.totalorder %s32, 1
      %p328 = por %p326, %p327
      %p329 = scmp.ne.s32.totalorder %s318, %s319
      %p330 = scmp.eq.s32.totalorder %s32, 0
      %p331 = por %p329, %p330
      %p332 = scmp.ne.s32.totalorder %s318, %s319
      %p333 = scmp.eq.s32.totalorder %s33, 1
      %p334 = por %p332, %p333
      %p336 = scmp.ne.s32.totalorder %s319, %s335
      %p337 = scmp.eq.s32.totalorder %s33, 0
      %p338 = por %p336, %p337
      %p339 = scmp.le.s32.totalorder 1, %s27
      %p340 = scmp.lt.s32.totalorder %s27, 3
      %p341 = pnand %p339, %p340
      %p342 = pneg %p341
      // Predicated region
      $region9: #{tpu_custom_call.1} parent=5 // pred_check
        _
      $region10: #{tpu_custom_call.1} parent=5 // pred_check_branch
        %344 = sbr.rel (%p341) target = $region12
      $region11: #{tpu_custom_call.1} parent=5 // pred_region
        %s345 = ssub.s32 %s27, 1
        // Predicated region
        $region13: #{tpu_custom_call.1} parent=11 // pred_check
          %p346 = pneg %p74
        $region14: #{tpu_custom_call.1} parent=11 // pred_check_branch
          %348 = sbr.rel (%p346) target = $region16
        $region15: #{tpu_custom_call.1} parent=11 // pred_region
          %s350 = ssub.s32 1024, 1024
          %351 = vsyncadd [#allocation6], %s350
          %s352 = sshll.u32 [#allocation5], 4
          %s353 = int_to_ptr.vmem [resolvable:$true] %s352
          %358 = dma.hbm_to_vmem [thread:$0]  %s1, 1024, %s353, [#allocation6], 64, 64, 4
        $region16: #{tpu_custom_call.1} parent=11 // pred_fallthru
          _
        // Predicated region
        $region17: #{tpu_custom_call.1} parent=11 // pred_check
          %p359 = pneg %p95
        $region18: #{tpu_custom_call.1} parent=11 // pred_check_branch
          %361 = sbr.rel (%p359) target = $region20
        $region19: #{tpu_custom_call.1} parent=11 // pred_region
          _
        $region20: #{tpu_custom_call.1} parent=11 // pred_fallthru
          _
        // Predicated region
        $region21: #{tpu_custom_call.1} parent=11 // pred_check
          %p362 = pneg %p116
        $region22: #{tpu_custom_call.1} parent=11 // pred_check_branch
          %364 = sbr.rel (%p362) target = $region24
        $region23: #{tpu_custom_call.1} parent=11 // pred_region
          _
        $region24: #{tpu_custom_call.1} parent=11 // pred_fallthru
          _
        // Predicated region
        $region25: #{tpu_custom_call.1} parent=11 // pred_check
          %p365 = pneg %p137
        $region26: #{tpu_custom_call.1} parent=11 // pred_check_branch
          %367 = sbr.rel (%p365) target = $region28
        $region27: #{tpu_custom_call.1} parent=11 // pred_region
          _
        $region28: #{tpu_custom_call.1} parent=11 // pred_fallthru
          _
        // Predicated region
        $region29: #{tpu_custom_call.1} parent=11 // pred_check
          %p368 = pneg %p158
        $region30: #{tpu_custom_call.1} parent=11 // pred_check_branch
          %370 = sbr.rel (%p368) target = $region32
        $region31: #{tpu_custom_call.1} parent=11 // pred_region
          %s372 = ssub.s32 2048, 2048
          %373 = vsyncadd [#allocation6], %s372
          %s374 = sshll.u32 [#allocation7], 4
          %s375 = int_to_ptr.vmem [resolvable:$true] %s374
          %380 = dma.hbm_to_vmem [thread:$0]  %s5, 2048, %s375, [#allocation6], 64, 64, 4
        $region32: #{tpu_custom_call.1} parent=11 // pred_fallthru
          _
        // Predicated region
        $region33: #{tpu_custom_call.1} parent=11 // pred_check
          %p381 = pneg %p179
        $region34: #{tpu_custom_call.1} parent=11 // pred_check_branch
          %383 = sbr.rel (%p381) target = $region36
        $region35: #{tpu_custom_call.1} parent=11 // pred_region
          _
        $region36: #{tpu_custom_call.1} parent=11 // pred_fallthru
          _
        // Predicated region
        $region37: #{tpu_custom_call.1} parent=11 // pred_check
          %p384 = pneg %p200
        $region38: #{tpu_custom_call.1} parent=11 // pred_check_branch
          %386 = sbr.rel (%p384) target = $region40
        $region39: #{tpu_custom_call.1} parent=11 // pred_region
          %s388 = ssub.s32 2048, 2048
          %389 = vsyncadd [#allocation9], %s388
          %s390 = sshll.u32 [#allocation8], 4
          %s391 = int_to_ptr.vmem [resolvable:$true] %s390
          %396 = dma.hbm_to_vmem [thread:$0]  %s7, 2048, %s391, [#allocation9], 64, 64, 4
        $region40: #{tpu_custom_call.1} parent=11 // pred_fallthru
          _
        // Predicated region
        $region41: #{tpu_custom_call.1} parent=11 // pred_check
          %p397 = pneg %p221
        $region42: #{tpu_custom_call.1} parent=11 // pred_check_branch
          %399 = sbr.rel (%p397) target = $region44
        $region43: #{tpu_custom_call.1} parent=11 // pred_region
          _
        $region44: #{tpu_custom_call.1} parent=11 // pred_fallthru
          _
        // Predicated region
        $region45: #{tpu_custom_call.1} parent=11 // pred_check
          %p400 = pneg %p242
        $region46: #{tpu_custom_call.1} parent=11 // pred_check_branch
          %402 = sbr.rel (%p400) target = $region48
        $region47: #{tpu_custom_call.1} parent=11 // pred_region
          _
        $region48: #{tpu_custom_call.1} parent=11 // pred_fallthru
          _
        // Predicated region
        $region49: #{tpu_custom_call.1} parent=11 // pred_check
          %p403 = pneg %p263
        $region50: #{tpu_custom_call.1} parent=11 // pred_check_branch
          %405 = sbr.rel (%p403) target = $region52
        $region51: #{tpu_custom_call.1} parent=11 // pred_region
          _
        $region52: #{tpu_custom_call.1} parent=11 // pred_fallthru
          _
        // Predicated region
        $region53: #{tpu_custom_call.1} parent=11 // pred_check
          %p406 = pneg %p284
        $region54: #{tpu_custom_call.1} parent=11 // pred_check_branch
          %408 = sbr.rel (%p406) target = $region56
        $region55: #{tpu_custom_call.1} parent=11 // pred_region
          %s410 = ssub.s32 1024, 1024
          %411 = vsyncadd [#allocation9], %s410
          %s412 = sshll.u32 [#allocation10], 4
          %s413 = int_to_ptr.vmem [resolvable:$true] %s412
          %418 = dma.hbm_to_vmem [thread:$0]  %s11, 1024, %s413, [#allocation9], 64, 64, 4
        $region56: #{tpu_custom_call.1} parent=11 // pred_fallthru
          _
        // Predicated region
        $region57: #{tpu_custom_call.1} parent=11 // pred_check
          %p419 = pneg %p305
        $region58: #{tpu_custom_call.1} parent=11 // pred_check_branch
          %421 = sbr.rel (%p419) target = $region60
        $region59: #{tpu_custom_call.1} parent=11 // pred_region
          _
        $region60: #{tpu_custom_call.1} parent=11 // pred_fallthru
          _
      $region12: #{tpu_custom_call.1} parent=5 // pred_fallthru
        _
      %p422 = scmp.lt.s32.totalorder %s27, 2
      // Predicated region
      $region61: #{tpu_custom_call.1} parent=5 // pred_check
        %p423 = pneg %p422
      $region62: #{tpu_custom_call.1} parent=5 // pred_check_branch
        %425 = sbr.rel (%p423) target = $region64
      $region63: #{tpu_custom_call.1} parent=5 // pred_region
        // Predicated region
        $region65: #{tpu_custom_call.1} parent=63 // pred_check
          %p426 = pneg %p47
        $region66: #{tpu_custom_call.1} parent=63 // pred_check_branch
          %428 = sbr.rel (%p426) target = $region68
        $region67: #{tpu_custom_call.1} parent=63 // pred_region
          %s429 = sand.u32 %s37, 1
          %s430 = scalar_lea.sflag [#allocation3], %s429
          %s431 = sand.u32 %s37, 1
          %s432 = smul.addr %s431, 8
          %s433 = scalar_lea.vmem [#allocation2], %s432
          %s435 = ssub.s32 128, 128
          %436 = vsyncadd %s430, %s435
          %s437 = smul.addr %s27, 128
          %s438 = scalar_lea.hbm %s0, %s437
          %s440 = sshll.u32 %s433, 4
          %s441 = int_to_ptr.vmem [resolvable:$true] %s440
          %443 = dma.hbm_to_vmem [thread:$0]  %s438, 128, %s441, %s430
        $region68: #{tpu_custom_call.1} parent=63 // pred_fallthru
          _
      $region64: #{tpu_custom_call.1} parent=5 // pred_fallthru
        _
      %p444 = scmp.le.s32.totalorder 1, %s27
      %p445 = scmp.lt.s32.totalorder %s27, 3
      %p446 = pnand %p444, %p445
      %p447 = pneg %p446
      // Predicated region
      $region69: #{tpu_custom_call.1} parent=5 // pred_check
        _
      $region70: #{tpu_custom_call.1} parent=5 // pred_check_branch
        %449 = sbr.rel (%p446) target = $region72
      $region71: #{tpu_custom_call.1} parent=5 // pred_region
        %s450 = ssub.s32 %s27, 1
        %s451 = sand.u32 %s40, 1
        %s452 = scalar_lea.sflag [#allocation3], %s451
        %s453 = sand.u32 %s40, 1
        %s454 = smul.addr %s453, 8
        %s455 = scalar_lea.vmem [#allocation2], %s454
        // Predicated region
        $region73: #{tpu_custom_call.1} parent=71 // pred_check
          %p456 = pneg %p53
        $region74: #{tpu_custom_call.1} parent=71 // pred_check_branch
          %458 = sbr.rel (%p456) target = $region76
        $region75: #{tpu_custom_call.1} parent=71 // pred_region
          %459 = dma.done %s452, 128
        $region76: #{tpu_custom_call.1} parent=71 // pred_fallthru
          _
        // Predicated region
        $region77: #{tpu_custom_call.1} parent=71 // pred_check
          %p460 = pneg %p74
        $region78: #{tpu_custom_call.1} parent=71 // pred_check_branch
          %462 = sbr.rel (%p460) target = $region80
        $region79: #{tpu_custom_call.1} parent=71 // pred_region
          %463 = dma.done [#allocation6], 1024
        $region80: #{tpu_custom_call.1} parent=71 // pred_fallthru
          _
        // Predicated region
        $region81: #{tpu_custom_call.1} parent=71 // pred_check
          %p464 = pneg %p158
        $region82: #{tpu_custom_call.1} parent=71 // pred_check_branch
          %466 = sbr.rel (%p464) target = $region84
        $region83: #{tpu_custom_call.1} parent=71 // pred_region
          %467 = dma.done [#allocation6], 2048
        $region84: #{tpu_custom_call.1} parent=71 // pred_fallthru
          _
        // Predicated region
        $region85: #{tpu_custom_call.1} parent=71 // pred_check
          %p468 = pneg %p200
        $region86: #{tpu_custom_call.1} parent=71 // pred_check_branch
          %470 = sbr.rel (%p468) target = $region88
        $region87: #{tpu_custom_call.1} parent=71 // pred_region
          %471 = dma.done [#allocation9], 2048
        $region88: #{tpu_custom_call.1} parent=71 // pred_fallthru
          _
        // Predicated region
        $region89: #{tpu_custom_call.1} parent=71 // pred_check
          %p472 = pneg %p284
        $region90: #{tpu_custom_call.1} parent=71 // pred_check_branch
          %474 = sbr.rel (%p472) target = $region92
        $region91: #{tpu_custom_call.1} parent=71 // pred_region
          %475 = dma.done [#allocation9], 1024
        $region92: #{tpu_custom_call.1} parent=71 // pred_fallthru
          _
        %s476 = sand.u32 %s40, 1
        %s477 = scalar_lea.sflag [#allocation3], %s476
        %s478 = sand.u32 %s40, 1
        %s479 = smul.addr %s478, 8
        %s480 = scalar_lea.vmem [#allocation2], %s479
        %p481 = pneg %p53
        %p482 = pneg %p50
        %p483 = pneg %p74
        %p484 = pneg %p71
        %p485 = pneg %p95
        %p486 = pneg %p92
        %p487 = pneg %p116
        %p488 = pneg %p113
        %p489 = pneg %p137
        %p490 = pneg %p134
        %p491 = pneg %p158
        %p492 = pneg %p155
        %p493 = pneg %p179
        %p494 = pneg %p176
        %p495 = pneg %p200
        %p496 = pneg %p197
        %p497 = pneg %p221
        %p498 = pneg %p218
        %p499 = pneg %p242
        %p500 = pneg %p239
        %p501 = pneg %p263
        %p502 = pneg %p260
        %p503 = pneg %p284
        %p504 = pneg %p281
        %p505 = pneg %p305
        %p506 = pneg %p302
        %p507 = pneg %p331
        %p508 = pneg %p328
        %s509 = sand.u32 %s318, 1
        %s510 = scalar_lea.sflag [#allocation4], %s509
        %s511 = sand.u32 %s318, 1
        %s512 = smul.addr %s511, 8
        %s513 = scalar_lea.vmem [#allocation11], %s512
        %v515 = vld [vmem:[%s455] sm:$0xff]
        %v516 = vpack.c.bf16 %v515, %v515
        %v517 = vld [vmem:[#allocation5] sm:$0xf]
        %v518 = vld [vmem:[#allocation5 + $0x4] sm:$0xf]
        %v519 = vld [vmem:[#allocation5 + $0x8] sm:$0xf]
        %v520 = vld [vmem:[#allocation5 + $0xc] sm:$0xf]
        %v521 = vld [vmem:[#allocation5 + $0x10] sm:$0xf]
        %v522 = vld [vmem:[#allocation5 + $0x14] sm:$0xf]
        %v523 = vld [vmem:[#allocation5 + $0x18] sm:$0xf]
        %v524 = vld [vmem:[#allocation5 + $0x1c] sm:$0xf]
        %v525 = vld [vmem:[#allocation5 + $0x20] sm:$0xf]
        %v526 = vld [vmem:[#allocation5 + $0x24] sm:$0xf]
        %v527 = vld [vmem:[#allocation5 + $0x28] sm:$0xf]
        %v528 = vld [vmem:[#allocation5 + $0x2c] sm:$0xf]
        %v529 = vld [vmem:[#allocation5 + $0x30] sm:$0xf]
        %v530 = vld [vmem:[#allocation5 + $0x34] sm:$0xf]
        %v531 = vld [vmem:[#allocation5 + $0x38] sm:$0xf]
        %v532 = vld [vmem:[#allocation5 + $0x3c] sm:$0xf]
        %v533 = vld [vmem:[%s2] sm:$0x1]
        %v535 = vlaneseq
        %v536 = vshrl.u32 %v535, 7
        %v537 = vsub.s32 0, %v536
        %v538 = vrot.slane %v533, %v537
        %v556 = vunpack.c.l.b16 %v517
        %v557 = vunpack.c.l.b16 %v518
        %v558 = vunpack.c.l.b16 %v519
        %v559 = vunpack.c.l.b16 %v520
        %v560 = vunpack.c.l.b16 %v521
        %v561 = vunpack.c.l.b16 %v522
        %v562 = vunpack.c.l.b16 %v523
        %v563 = vunpack.c.l.b16 %v524
        %v564 = vunpack.c.l.b16 %v525
        %v565 = vunpack.c.l.b16 %v526
        %v566 = vunpack.c.l.b16 %v527
        %v567 = vunpack.c.l.b16 %v528
        %v568 = vunpack.c.l.b16 %v529
        %v569 = vunpack.c.l.b16 %v530
        %v570 = vunpack.c.l.b16 %v531
        %v571 = vunpack.c.l.b16 %v532
        %v572 = vpack.c.b16 %v557, %v556
        %v573 = vpack.c.b16 %v559, %v558
        %v574 = vpack.c.b16 %v561, %v560
        %v575 = vpack.c.b16 %v563, %v562
        %v576 = vpack.c.b16 %v565, %v564
        %v577 = vpack.c.b16 %v567, %v566
        %v578 = vpack.c.b16 %v569, %v568
        %v579 = vpack.c.b16 %v571, %v570
        %588 = vmatprep.subr.bf16.mxu0 0
        %589 = vmatpush1.bf16.msra.mxu0 %v572
        %590 = vmatprep.subr.bf16.mxu0 0
        %591 = vmatpush1.bf16.msra.mxu0 %v573
        %592 = vmatprep.subr.bf16.mxu0 0
        %593 = vmatpush1.bf16.msra.mxu0 %v574
        %594 = vmatprep.subr.bf16.mxu0 0
        %595 = vmatpush1.bf16.msra.mxu0 %v575
        %596 = vmatprep.subr.bf16.mxu0 0
        %597 = vmatpush1.bf16.msra.mxu0 %v576
        %598 = vmatprep.subr.bf16.mxu0 0
        %599 = vmatpush1.bf16.msra.mxu0 %v577
        %600 = vmatprep.subr.bf16.mxu0 0
        %601 = vmatpush1.bf16.msra.mxu0 %v578
        %602 = vmatprep.subr.bf16.mxu0 0
        %603 = vmatpush1.bf16.msra.mxu0 %v579
        %604 = vmatprep.subr.bf16.mxu0 0
        %605 = vmatpush1.bf16.msra.mxu0 0
        %606 = vmatprep.subr.bf16.mxu0 0
        %607 = vmatpush1.bf16.msra.mxu0 0
        %608 = vmatprep.subr.bf16.mxu0 0
        %609 = vmatpush1.bf16.msra.mxu0 0
        %610 = vmatprep.subr.bf16.mxu0 0
        %611 = vmatpush1.bf16.msra.mxu0 0
        %612 = vmatprep.subr.bf16.mxu0 0
        %613 = vmatpush1.bf16.msra.mxu0 0
        %614 = vmatprep.subr.bf16.mxu0 0
        %615 = vmatpush1.bf16.msra.mxu0 0
        %616 = vmatprep.subr.bf16.mxu0 0
        %617 = vmatpush1.bf16.msra.mxu0 0
        %618 = vmatprep.subr.bf16.mxu0 0
        %619 = vmatpush1.bf16.msra.mxu0 0
        %620 = vmatprep.mubr.bf16.mxu0 0
        %621 = vmatmul.mubr.bf16.gmra.mrb[0].mxu0 %v516
        %v622 = vpop.f32.mrb[0].mxu0
        %v623 = vadd.f32 %v538, %v622
        %v624 = vpop.f32.mrb[0].mxu0
        %v625 = vpop.f32.mrb[0].mxu0
        %v626 = vpop.f32.mrb[0].mxu0
        %627 = vdwg.mxu0
        %v628 = vld [vmem:[%s3] sm:$0x1]
        %v629 = vlaneseq
        %v630 = vshrl.u32 %v629, 7
        %v631 = vsub.s32 0, %v630
        %v632 = vrot.slane %v628, %v631
        %v633 = vmul.f32 %v623, %v632
        %v634 = vld [vmem:[%s4] sm:$0x1]
        %v635 = vlaneseq
        %v636 = vshrl.u32 %v635, 7
        %v637 = vsub.s32 0, %v636
        %v638 = vrot.slane %v634, %v637
        %v639 = vadd.f32 %v633, %v638
        %v640 = vpack.c.bf16 %v639, %v639
        %v641 = vld [vmem:[#allocation7] sm:$0xf]
        %v642 = vld [vmem:[#allocation7 + $0x4] sm:$0xf]
        %v643 = vld [vmem:[#allocation7 + $0x8] sm:$0xf]
        %v644 = vld [vmem:[#allocation7 + $0xc] sm:$0xf]
        %v645 = vld [vmem:[#allocation7 + $0x10] sm:$0xf]
        %v646 = vld [vmem:[#allocation7 + $0x14] sm:$0xf]
        %v647 = vld [vmem:[#allocation7 + $0x18] sm:$0xf]
        %v648 = vld [vmem:[#allocation7 + $0x1c] sm:$0xf]
        %v649 = vld [vmem:[#allocation7 + $0x20] sm:$0xf]
        %v650 = vld [vmem:[#allocation7 + $0x24] sm:$0xf]
        %v651 = vld [vmem:[#allocation7 + $0x28] sm:$0xf]
        %v652 = vld [vmem:[#allocation7 + $0x2c] sm:$0xf]
        %v653 = vld [vmem:[#allocation7 + $0x30] sm:$0xf]
        %v654 = vld [vmem:[#allocation7 + $0x34] sm:$0xf]
        %v655 = vld [vmem:[#allocation7 + $0x38] sm:$0xf]
        %v656 = vld [vmem:[#allocation7 + $0x3c] sm:$0xf]
        %v657 = vld [vmem:[%s6] sm:$0x1]
        %v658 = vlaneseq
        %v659 = vshrl.u32 %v658, 7
        %v660 = vsub.s32 0, %v659
        %v661 = vrot.slane %v657, %v660
        %v678 = vunpack.c.l.b16 %v641
        %v679 = vunpack.c.l.b16 %v642
        %v680 = vunpack.c.l.b16 %v643
        %v681 = vunpack.c.l.b16 %v644
        %v682 = vunpack.c.l.b16 %v645
        %v683 = vunpack.c.l.b16 %v646
        %v684 = vunpack.c.l.b16 %v647
        %v685 = vunpack.c.l.b16 %v648
        %v686 = vunpack.c.l.b16 %v649
        %v687 = vunpack.c.l.b16 %v650
        %v688 = vunpack.c.l.b16 %v651
        %v689 = vunpack.c.l.b16 %v652
        %v690 = vunpack.c.l.b16 %v653
        %v691 = vunpack.c.l.b16 %v654
        %v692 = vunpack.c.l.b16 %v655
        %v693 = vunpack.c.l.b16 %v656
        %v694 = vpack.c.b16 %v679, %v678
        %v695 = vpack.c.b16 %v681, %v680
        %v696 = vpack.c.b16 %v683, %v682
        %v697 = vpack.c.b16 %v685, %v684
        %v698 = vpack.c.b16 %v687, %v686
        %v699 = vpack.c.b16 %v689, %v688
        %v700 = vpack.c.b16 %v691, %v690
        %v701 = vpack.c.b16 %v693, %v692
        %710 = vmatprep.subr.bf16.mxu0 0
        %711 = vmatpush1.bf16.msra.mxu0 %v694
        %712 = vmatprep.subr.bf16.mxu0 0
        %713 = vmatpush1.bf16.msra.mxu0 %v695
        %714 = vmatprep.subr.bf16.mxu0 0
        %715 = vmatpush1.bf16.msra.mxu0 %v696
        %716 = vmatprep.subr.bf16.mxu0 0
        %717 = vmatpush1.bf16.msra.mxu0 %v697
        %718 = vmatprep.subr.bf16.mxu0 0
        %719 = vmatpush1.bf16.msra.mxu0 %v698
        %720 = vmatprep.subr.bf16.mxu0 0
        %721 = vmatpush1.bf16.msra.mxu0 %v699
        %722 = vmatprep.subr.bf16.mxu0 0
        %723 = vmatpush1.bf16.msra.mxu0 %v700
        %724 = vmatprep.subr.bf16.mxu0 0
        %725 = vmatpush1.bf16.msra.mxu0 %v701
        %726 = vmatprep.subr.bf16.mxu0 0
        %727 = vmatpush1.bf16.msra.mxu0 0
        %728 = vmatprep.subr.bf16.mxu0 0
        %729 = vmatpush1.bf16.msra.mxu0 0
        %730 = vmatprep.subr.bf16.mxu0 0
        %731 = vmatpush1.bf16.msra.mxu0 0
        %732 = vmatprep.subr.bf16.mxu0 0
        %733 = vmatpush1.bf16.msra.mxu0 0
        %734 = vmatprep.subr.bf16.mxu0 0
        %735 = vmatpush1.bf16.msra.mxu0 0
        %736 = vmatprep.subr.bf16.mxu0 0
        %737 = vmatpush1.bf16.msra.mxu0 0
        %738 = vmatprep.subr.bf16.mxu0 0
        %739 = vmatpush1.bf16.msra.mxu0 0
        %740 = vmatprep.subr.bf16.mxu0 0
        %741 = vmatpush1.bf16.msra.mxu0 0
        %742 = vmatprep.mubr.bf16.mxu0 0
        %743 = vmatmul.mubr.bf16.gmra.mrb[0].mxu0 %v640
        %v744 = vpop.f32.mrb[0].mxu0
        %v745 = vadd.f32 %v661, %v744
        %v746 = vpop.f32.mrb[0].mxu0
        %v747 = vpop.f32.mrb[0].mxu0
        %v748 = vpop.f32.mrb[0].mxu0
        %749 = vdwg.mxu0
        %v750 = vmax.f32 %v745, 0.0
        %v751 = vpack.c.bf16 %v750, %v750
        %v752 = vld [vmem:[#allocation8] sm:$0xf]
        %v753 = vld [vmem:[#allocation8 + $0x4] sm:$0xf]
        %v754 = vld [vmem:[#allocation8 + $0x8] sm:$0xf]
        %v755 = vld [vmem:[#allocation8 + $0xc] sm:$0xf]
        %v756 = vld [vmem:[#allocation8 + $0x10] sm:$0xf]
        %v757 = vld [vmem:[#allocation8 + $0x14] sm:$0xf]
        %v758 = vld [vmem:[#allocation8 + $0x18] sm:$0xf]
        %v759 = vld [vmem:[#allocation8 + $0x1c] sm:$0xf]
        %v760 = vld [vmem:[#allocation8 + $0x20] sm:$0xf]
        %v761 = vld [vmem:[#allocation8 + $0x24] sm:$0xf]
        %v762 = vld [vmem:[#allocation8 + $0x28] sm:$0xf]
        %v763 = vld [vmem:[#allocation8 + $0x2c] sm:$0xf]
        %v764 = vld [vmem:[#allocation8 + $0x30] sm:$0xf]
        %v765 = vld [vmem:[#allocation8 + $0x34] sm:$0xf]
        %v766 = vld [vmem:[#allocation8 + $0x38] sm:$0xf]
        %v767 = vld [vmem:[#allocation8 + $0x3c] sm:$0xf]
        %v768 = vld [vmem:[%s8] sm:$0x1]
        %v769 = vlaneseq
        %v770 = vshrl.u32 %v769, 7
        %v771 = vsub.s32 0, %v770
        %v772 = vrot.slane %v768, %v771
        %v789 = vunpack.c.l.b16 %v752
        %v790 = vunpack.c.l.b16 %v753
        %v791 = vunpack.c.l.b16 %v754
        %v792 = vunpack.c.l.b16 %v755
        %v793 = vunpack.c.l.b16 %v756
        %v794 = vunpack.c.l.b16 %v757
        %v795 = vunpack.c.l.b16 %v758
        %v796 = vunpack.c.l.b16 %v759
        %v797 = vunpack.c.l.b16 %v760
        %v798 = vunpack.c.l.b16 %v761
        %v799 = vunpack.c.l.b16 %v762
        %v800 = vunpack.c.l.b16 %v763
        %v801 = vunpack.c.l.b16 %v764
        %v802 = vunpack.c.l.b16 %v765
        %v803 = vunpack.c.l.b16 %v766
        %v804 = vunpack.c.l.b16 %v767
        %v805 = vpack.c.b16 %v790, %v789
        %v806 = vpack.c.b16 %v792, %v791
        %v807 = vpack.c.b16 %v794, %v793
        %v808 = vpack.c.b16 %v796, %v795
        %v809 = vpack.c.b16 %v798, %v797
        %v810 = vpack.c.b16 %v800, %v799
        %v811 = vpack.c.b16 %v802, %v801
        %v812 = vpack.c.b16 %v804, %v803
        %821 = vmatprep.subr.bf16.mxu0 0
        %822 = vmatpush1.bf16.msra.mxu0 %v805
        %823 = vmatprep.subr.bf16.mxu0 0
        %824 = vmatpush1.bf16.msra.mxu0 %v806
        %825 = vmatprep.subr.bf16.mxu0 0
        %826 = vmatpush1.bf16.msra.mxu0 %v807
        %827 = vmatprep.subr.bf16.mxu0 0
        %828 = vmatpush1.bf16.msra.mxu0 %v808
        %829 = vmatprep.subr.bf16.mxu0 0
        %830 = vmatpush1.bf16.msra.mxu0 %v809
        %831 = vmatprep.subr.bf16.mxu0 0
        %832 = vmatpush1.bf16.msra.mxu0 %v810
        %833 = vmatprep.subr.bf16.mxu0 0
        %834 = vmatpush1.bf16.msra.mxu0 %v811
        %835 = vmatprep.subr.bf16.mxu0 0
        %836 = vmatpush1.bf16.msra.mxu0 %v812
        %837 = vmatprep.subr.bf16.mxu0 0
        %838 = vmatpush1.bf16.msra.mxu0 0
        %839 = vmatprep.subr.bf16.mxu0 0
        %840 = vmatpush1.bf16.msra.mxu0 0
        %841 = vmatprep.subr.bf16.mxu0 0
        %842 = vmatpush1.bf16.msra.mxu0 0
        %843 = vmatprep.subr.bf16.mxu0 0
        %844 = vmatpush1.bf16.msra.mxu0 0
        %845 = vmatprep.subr.bf16.mxu0 0
        %846 = vmatpush1.bf16.msra.mxu0 0
        %847 = vmatprep.subr.bf16.mxu0 0
        %848 = vmatpush1.bf16.msra.mxu0 0
        %849 = vmatprep.subr.bf16.mxu0 0
        %850 = vmatpush1.bf16.msra.mxu0 0
        %851 = vmatprep.subr.bf16.mxu0 0
        %852 = vmatpush1.bf16.msra.mxu0 0
        %853 = vmatprep.mubr.bf16.mxu0 0
        %854 = vmatmul.mubr.bf16.gmra.mrb[0].mxu0 %v751
        %v855 = vpop.f32.mrb[0].mxu0
        %v856 = vadd.f32 %v772, %v855
        %v857 = vpop.f32.mrb[0].mxu0
        %v858 = vpop.f32.mrb[0].mxu0
        %v859 = vpop.f32.mrb[0].mxu0
        %860 = vdwg.mxu0
        %v861 = vadd.f32 %v623, %v856
        %v862 = vld [vmem:[%s3 + $0x1] sm:$0x1]
        %v863 = vlaneseq
        %v864 = vshrl.u32 %v863, 7
        %v865 = vsub.s32 0, %v864
        %v866 = vrot.slane %v862, %v865
        %v867 = vmul.f32 %v861, %v866
        %v868 = vld [vmem:[%s4 + $0x1] sm:$0x1]
        %v869 = vlaneseq
        %v870 = vshrl.u32 %v869, 7
        %v871 = vsub.s32 0, %v870
        %v872 = vrot.slane %v868, %v871
        %v873 = vadd.f32 %v867, %v872
        %v874 = vpack.c.bf16 %v873, %v873
        %s875 = scalar_lea.vmem [#allocation7], 64
        %v876 = vld [vmem:[%s875] sm:$0xf]
        %v877 = vld [vmem:[%s875 + $0x4] sm:$0xf]
        %v878 = vld [vmem:[%s875 + $0x8] sm:$0xf]
        %v879 = vld [vmem:[%s875 + $0xc] sm:$0xf]
        %v880 = vld [vmem:[%s875 + $0x10] sm:$0xf]
        %v881 = vld [vmem:[%s875 + $0x14] sm:$0xf]
        %v882 = vld [vmem:[%s875 + $0x18] sm:$0xf]
        %v883 = vld [vmem:[%s875 + $0x1c] sm:$0xf]
        %v884 = vld [vmem:[%s875 + $0x20] sm:$0xf]
        %v885 = vld [vmem:[%s875 + $0x24] sm:$0xf]
        %v886 = vld [vmem:[%s875 + $0x28] sm:$0xf]
        %v887 = vld [vmem:[%s875 + $0x2c] sm:$0xf]
        %v888 = vld [vmem:[%s875 + $0x30] sm:$0xf]
        %v889 = vld [vmem:[%s875 + $0x34] sm:$0xf]
        %v890 = vld [vmem:[%s875 + $0x38] sm:$0xf]
        %v891 = vld [vmem:[%s875 + $0x3c] sm:$0xf]
        %v892 = vld [vmem:[%s6 + $0x1] sm:$0x1]
        %v893 = vlaneseq
        %v894 = vshrl.u32 %v893, 7
        %v895 = vsub.s32 0, %v894
        %v896 = vrot.slane %v892, %v895
        %v913 = vunpack.c.l.b16 %v876
        %v914 = vunpack.c.l.b16 %v877
        %v915 = vunpack.c.l.b16 %v878
        %v916 = vunpack.c.l.b16 %v879
        %v917 = vunpack.c.l.b16 %v880
        %v918 = vunpack.c.l.b16 %v881
        %v919 = vunpack.c.l.b16 %v882
        %v920 = vunpack.c.l.b16 %v883
        %v921 = vunpack.c.l.b16 %v884
        %v922 = vunpack.c.l.b16 %v885
        %v923 = vunpack.c.l.b16 %v886
        %v924 = vunpack.c.l.b16 %v887
        %v925 = vunpack.c.l.b16 %v888
        %v926 = vunpack.c.l.b16 %v889
        %v927 = vunpack.c.l.b16 %v890
        %v928 = vunpack.c.l.b16 %v891
        %v929 = vpack.c.b16 %v914, %v913
        %v930 = vpack.c.b16 %v916, %v915
        %v931 = vpack.c.b16 %v918, %v917
        %v932 = vpack.c.b16 %v920, %v919
        %v933 = vpack.c.b16 %v922, %v921
        %v934 = vpack.c.b16 %v924, %v923
        %v935 = vpack.c.b16 %v926, %v925
        %v936 = vpack.c.b16 %v928, %v927
        %945 = vmatprep.subr.bf16.mxu0 0
        %946 = vmatpush1.bf16.msra.mxu0 %v929
        %947 = vmatprep.subr.bf16.mxu0 0
        %948 = vmatpush1.bf16.msra.mxu0 %v930
        %949 = vmatprep.subr.bf16.mxu0 0
        %950 = vmatpush1.bf16.msra.mxu0 %v931
        %951 = vmatprep.subr.bf16.mxu0 0
        %952 = vmatpush1.bf16.msra.mxu0 %v932
        %953 = vmatprep.subr.bf16.mxu0 0
        %954 = vmatpush1.bf16.msra.mxu0 %v933
        %955 = vmatprep.subr.bf16.mxu0 0
        %956 = vmatpush1.bf16.msra.mxu0 %v934
        %957 = vmatprep.subr.bf16.mxu0 0
        %958 = vmatpush1.bf16.msra.mxu0 %v935
        %959 = vmatprep.subr.bf16.mxu0 0
        %960 = vmatpush1.bf16.msra.mxu0 %v936
        %961 = vmatprep.subr.bf16.mxu0 0
        %962 = vmatpush1.bf16.msra.mxu0 0
        %963 = vmatprep.subr.bf16.mxu0 0
        %964 = vmatpush1.bf16.msra.mxu0 0
        %965 = vmatprep.subr.bf16.mxu0 0
        %966 = vmatpush1.bf16.msra.mxu0 0
        %967 = vmatprep.subr.bf16.mxu0 0
        %968 = vmatpush1.bf16.msra.mxu0 0
        %969 = vmatprep.subr.bf16.mxu0 0
        %970 = vmatpush1.bf16.msra.mxu0 0
        %971 = vmatprep.subr.bf16.mxu0 0
        %972 = vmatpush1.bf16.msra.mxu0 0
        %973 = vmatprep.subr.bf16.mxu0 0
        %974 = vmatpush1.bf16.msra.mxu0 0
        %975 = vmatprep.subr.bf16.mxu0 0
        %976 = vmatpush1.bf16.msra.mxu0 0
        %977 = vmatprep.mubr.bf16.mxu0 0
        %978 = vmatmul.mubr.bf16.gmra.mrb[0].mxu0 %v874
        %v979 = vpop.f32.mrb[0].mxu0
        %v980 = vadd.f32 %v896, %v979
        %v981 = vpop.f32.mrb[0].mxu0
        %v982 = vpop.f32.mrb[0].mxu0
        %v983 = vpop.f32.mrb[0].mxu0
        %984 = vdwg.mxu0
        %v985 = vmax.f32 %v980, 0.0
        %v986 = vpack.c.bf16 %v985, %v985
        %s987 = scalar_lea.vmem [#allocation8], 64
        %v988 = vld [vmem:[%s987] sm:$0xf]
        %v989 = vld [vmem:[%s987 + $0x4] sm:$0xf]
        %v990 = vld [vmem:[%s987 + $0x8] sm:$0xf]
        %v991 = vld [vmem:[%s987 + $0xc] sm:$0xf]
        %v992 = vld [vmem:[%s987 + $0x10] sm:$0xf]
        %v993 = vld [vmem:[%s987 + $0x14] sm:$0xf]
        %v994 = vld [vmem:[%s987 + $0x18] sm:$0xf]
        %v995 = vld [vmem:[%s987 + $0x1c] sm:$0xf]
        %v996 = vld [vmem:[%s987 + $0x20] sm:$0xf]
        %v997 = vld [vmem:[%s987 + $0x24] sm:$0xf]
        %v998 = vld [vmem:[%s987 + $0x28] sm:$0xf]
        %v999 = vld [vmem:[%s987 + $0x2c] sm:$0xf]
        %v1000 = vld [vmem:[%s987 + $0x30] sm:$0xf]
        %v1001 = vld [vmem:[%s987 + $0x34] sm:$0xf]
        %v1002 = vld [vmem:[%s987 + $0x38] sm:$0xf]
        %v1003 = vld [vmem:[%s987 + $0x3c] sm:$0xf]
        %v1004 = vld [vmem:[%s8 + $0x1] sm:$0x1]
        %v1005 = vlaneseq
        %v1006 = vshrl.u32 %v1005, 7
        %v1007 = vsub.s32 0, %v1006
        %v1008 = vrot.slane %v1004, %v1007
        %v1025 = vunpack.c.l.b16 %v988
        %v1026 = vunpack.c.l.b16 %v989
        %v1027 = vunpack.c.l.b16 %v990
        %v1028 = vunpack.c.l.b16 %v991
        %v1029 = vunpack.c.l.b16 %v992
        %v1030 = vunpack.c.l.b16 %v993
        %v1031 = vunpack.c.l.b16 %v994
        %v1032 = vunpack.c.l.b16 %v995
        %v1033 = vunpack.c.l.b16 %v996
        %v1034 = vunpack.c.l.b16 %v997
        %v1035 = vunpack.c.l.b16 %v998
        %v1036 = vunpack.c.l.b16 %v999
        %v1037 = vunpack.c.l.b16 %v1000
        %v1038 = vunpack.c.l.b16 %v1001
        %v1039 = vunpack.c.l.b16 %v1002
        %v1040 = vunpack.c.l.b16 %v1003
        %v1041 = vpack.c.b16 %v1026, %v1025
        %v1042 = vpack.c.b16 %v1028, %v1027
        %v1043 = vpack.c.b16 %v1030, %v1029
        %v1044 = vpack.c.b16 %v1032, %v1031
        %v1045 = vpack.c.b16 %v1034, %v1033
        %v1046 = vpack.c.b16 %v1036, %v1035
        %v1047 = vpack.c.b16 %v1038, %v1037
        %v1048 = vpack.c.b16 %v1040, %v1039
        %1057 = vmatprep.subr.bf16.mxu0 0
        %1058 = vmatpush1.bf16.msra.mxu0 %v1041
        %1059 = vmatprep.subr.bf16.mxu0 0
        %1060 = vmatpush1.bf16.msra.mxu0 %v1042
        %1061 = vmatprep.subr.bf16.mxu0 0
        %1062 = vmatpush1.bf16.msra.mxu0 %v1043
        %1063 = vmatprep.subr.bf16.mxu0 0
        %1064 = vmatpush1.bf16.msra.mxu0 %v1044
        %1065 = vmatprep.subr.bf16.mxu0 0
        %1066 = vmatpush1.bf16.msra.mxu0 %v1045
        %1067 = vmatprep.subr.bf16.mxu0 0
        %1068 = vmatpush1.bf16.msra.mxu0 %v1046
        %1069 = vmatprep.subr.bf16.mxu0 0
        %1070 = vmatpush1.bf16.msra.mxu0 %v1047
        %1071 = vmatprep.subr.bf16.mxu0 0
        %1072 = vmatpush1.bf16.msra.mxu0 %v1048
        %1073 = vmatprep.subr.bf16.mxu0 0
        %1074 = vmatpush1.bf16.msra.mxu0 0
        %1075 = vmatprep.subr.bf16.mxu0 0
        %1076 = vmatpush1.bf16.msra.mxu0 0
        %1077 = vmatprep.subr.bf16.mxu0 0
        %1078 = vmatpush1.bf16.msra.mxu0 0
        %1079 = vmatprep.subr.bf16.mxu0 0
        %1080 = vmatpush1.bf16.msra.mxu0 0
        %1081 = vmatprep.subr.bf16.mxu0 0
        %1082 = vmatpush1.bf16.msra.mxu0 0
        %1083 = vmatprep.subr.bf16.mxu0 0
        %1084 = vmatpush1.bf16.msra.mxu0 0
        %1085 = vmatprep.subr.bf16.mxu0 0
        %1086 = vmatpush1.bf16.msra.mxu0 0
        %1087 = vmatprep.subr.bf16.mxu0 0
        %1088 = vmatpush1.bf16.msra.mxu0 0
        %1089 = vmatprep.mubr.bf16.mxu0 0
        %1090 = vmatmul.mubr.bf16.gmra.mrb[0].mxu0 %v986
        %v1091 = vpop.f32.mrb[0].mxu0
        %v1092 = vadd.f32 %v1008, %v1091
        %v1093 = vpop.f32.mrb[0].mxu0
        %v1094 = vpop.f32.mrb[0].mxu0
        %v1095 = vpop.f32.mrb[0].mxu0
        %1096 = vdwg.mxu0
        %v1097 = vadd.f32 %v861, %v1092
        %v1098 = vld [vmem:[%s9] sm:$0x1]
        %v1100 = vlaneseq
        %v1101 = vshrl.u32 %v1100, 7
        %v1102 = vsub.s32 0, %v1101
        %v1103 = vrot.slane %v1098, %v1102
        %v1105 = vmul.f32 %v1097, %v1103
        %v1106 = vld [vmem:[%s10] sm:$0x1]
        %v1108 = vlaneseq
        %v1109 = vshrl.u32 %v1108, 7
        %v1110 = vsub.s32 0, %v1109
        %v1111 = vrot.slane %v1106, %v1110
        %v1113 = vadd.f32 %v1105, %v1111
        %v1114 = vmax.f32 %v1113, 0.0
        %v1115 = vpack.c.bf16 %v1114, %v1114
        %v1116 = vld [vmem:[#allocation10] sm:$0xf]
        %v1117 = vld [vmem:[#allocation10 + $0x4] sm:$0xf]
        %v1118 = vld [vmem:[#allocation10 + $0x8] sm:$0xf]
        %v1119 = vld [vmem:[#allocation10 + $0xc] sm:$0xf]
        %v1120 = vld [vmem:[#allocation10 + $0x10] sm:$0xf]
        %v1121 = vld [vmem:[#allocation10 + $0x14] sm:$0xf]
        %v1122 = vld [vmem:[#allocation10 + $0x18] sm:$0xf]
        %v1123 = vld [vmem:[#allocation10 + $0x1c] sm:$0xf]
        %v1124 = vld [vmem:[#allocation10 + $0x20] sm:$0xf]
        %v1125 = vld [vmem:[#allocation10 + $0x24] sm:$0xf]
        %v1126 = vld [vmem:[#allocation10 + $0x28] sm:$0xf]
        %v1127 = vld [vmem:[#allocation10 + $0x2c] sm:$0xf]
        %v1128 = vld [vmem:[#allocation10 + $0x30] sm:$0xf]
        %v1129 = vld [vmem:[#allocation10 + $0x34] sm:$0xf]
        %v1130 = vld [vmem:[#allocation10 + $0x38] sm:$0xf]
        %v1131 = vld [vmem:[#allocation10 + $0x3c] sm:$0xf]
        %v1132 = vld [vmem:[%s12] sm:$0x1]
        %v1134 = vlaneseq
        %v1135 = vshrl.u32 %v1134, 7
        %v1136 = vsub.s32 0, %v1135
        %v1137 = vrot.slane %v1132, %v1136
        %v1155 = vunpack.c.l.b16 %v1116
        %v1156 = vunpack.c.l.b16 %v1117
        %v1157 = vunpack.c.l.b16 %v1118
        %v1158 = vunpack.c.l.b16 %v1119
        %v1159 = vunpack.c.l.b16 %v1120
        %v1160 = vunpack.c.l.b16 %v1121
        %v1161 = vunpack.c.l.b16 %v1122
        %v1162 = vunpack.c.l.b16 %v1123
        %v1163 = vunpack.c.l.b16 %v1124
        %v1164 = vunpack.c.l.b16 %v1125
        %v1165 = vunpack.c.l.b16 %v1126
        %v1166 = vunpack.c.l.b16 %v1127
        %v1167 = vunpack.c.l.b16 %v1128
        %v1168 = vunpack.c.l.b16 %v1129
        %v1169 = vunpack.c.l.b16 %v1130
        %v1170 = vunpack.c.l.b16 %v1131
        %v1171 = vpack.c.b16 %v1156, %v1155
        %v1172 = vpack.c.b16 %v1158, %v1157
        %v1173 = vpack.c.b16 %v1160, %v1159
        %v1174 = vpack.c.b16 %v1162, %v1161
        %v1175 = vpack.c.b16 %v1164, %v1163
        %v1176 = vpack.c.b16 %v1166, %v1165
        %v1177 = vpack.c.b16 %v1168, %v1167
        %v1178 = vpack.c.b16 %v1170, %v1169
        %1187 = vmatprep.subr.bf16.mxu0 0
        %1188 = vmatpush1.bf16.msra.mxu0 %v1171
        %1189 = vmatprep.subr.bf16.mxu0 0
        %1190 = vmatpush1.bf16.msra.mxu0 %v1172
        %1191 = vmatprep.subr.bf16.mxu0 0
        %1192 = vmatpush1.bf16.msra.mxu0 %v1173
        %1193 = vmatprep.subr.bf16.mxu0 0
        %1194 = vmatpush1.bf16.msra.mxu0 %v1174
        %1195 = vmatprep.subr.bf16.mxu0 0
        %1196 = vmatpush1.bf16.msra.mxu0 %v1175
        %1197 = vmatprep.subr.bf16.mxu0 0
        %1198 = vmatpush1.bf16.msra.mxu0 %v1176
        %1199 = vmatprep.subr.bf16.mxu0 0
        %1200 = vmatpush1.bf16.msra.mxu0 %v1177
        %1201 = vmatprep.subr.bf16.mxu0 0
        %1202 = vmatpush1.bf16.msra.mxu0 %v1178
        %1203 = vmatprep.subr.bf16.mxu0 0
        %1204 = vmatpush1.bf16.msra.mxu0 0
        %1205 = vmatprep.subr.bf16.mxu0 0
        %1206 = vmatpush1.bf16.msra.mxu0 0
        %1207 = vmatprep.subr.bf16.mxu0 0
        %1208 = vmatpush1.bf16.msra.mxu0 0
        %1209 = vmatprep.subr.bf16.mxu0 0
        %1210 = vmatpush1.bf16.msra.mxu0 0
        %1211 = vmatprep.subr.bf16.mxu0 0
        %1212 = vmatpush1.bf16.msra.mxu0 0
        %1213 = vmatprep.subr.bf16.mxu0 0
        %1214 = vmatpush1.bf16.msra.mxu0 0
        %1215 = vmatprep.subr.bf16.mxu0 0
        %1216 = vmatpush1.bf16.msra.mxu0 0
        %1217 = vmatprep.subr.bf16.mxu0 0
        %1218 = vmatpush1.bf16.msra.mxu0 0
        %1219 = vmatprep.mubr.bf16.mxu0 0
        %1220 = vmatmul.mubr.bf16.gmra.mrb[0].mxu0 %v1115
        %v1221 = vpop.f32.mrb[0].mxu0
        %v1222 = vadd.f32 %v1137, %v1221
        %v1223 = vpop.f32.mrb[0].mxu0
        %v1224 = vpop.f32.mrb[0].mxu0
        %v1225 = vpop.f32.mrb[0].mxu0
        %1226 = vdwg.mxu0
        %1227 = vst [vmem:[%s513] sm:$0xff] %v1222
        %s1228 = sand.u32 %s318, 1
        %s1229 = scalar_lea.sflag [#allocation4], %s1228
        %s1230 = sand.u32 %s318, 1
        %s1231 = smul.addr %s1230, 8
        %s1232 = scalar_lea.vmem [#allocation11], %s1231
        // Predicated region
        $region93: #{tpu_custom_call.1} parent=71 // pred_check
          %p1233 = pneg %p328
        $region94: #{tpu_custom_call.1} parent=71 // pred_check_branch
          %1235 = sbr.rel (%p1233) target = $region96
        $region95: #{tpu_custom_call.1} parent=71 // pred_region
          %s1237 = ssub.s32 128, 128
          %1238 = vsyncadd %s1229, %s1237
          %s1239 = smul.addr %s32, 128
          %s1240 = scalar_lea.hbm %s13, %s1239
          %s1242 = sshll.u32 %s1232, 4
          %s1243 = int_to_ptr.vmem [resolvable:$true] %s1242
          %1245 = dma.vmem_to_hbm [thread:$0]  %s1243, 128, %s1240, %s1229
        $region96: #{tpu_custom_call.1} parent=71 // pred_fallthru
          _
      $region72: #{tpu_custom_call.1} parent=5 // pred_fallthru
        _
      %p1246 = scmp.le.s32.totalorder 2, %s27
      // Predicated region
      $region97: #{tpu_custom_call.1} parent=5 // pred_check
        %p1247 = pneg %p1246
      $region98: #{tpu_custom_call.1} parent=5 // pred_check_branch
        %1249 = sbr.rel (%p1247) target = $region100
      $region99: #{tpu_custom_call.1} parent=5 // pred_region
        %s1250 = ssub.s32 %s27, 2
        // Predicated region
        $region101: #{tpu_custom_call.1} parent=99 // pred_check
          %p1251 = pneg %p334
        $region102: #{tpu_custom_call.1} parent=99 // pred_check_branch
          %1253 = sbr.rel (%p1251) target = $region104
        $region103: #{tpu_custom_call.1} parent=99 // pred_region
          %s1254 = sand.u32 %s319, 1
          %s1255 = scalar_lea.sflag [#allocation4], %s1254
          %s1256 = sand.u32 %s319, 1
          %s1257 = smul.addr %s1256, 8
          %s1258 = scalar_lea.vmem [#allocation11], %s1257
          %1259 = dma.done %s1255, 128
        $region104: #{tpu_custom_call.1} parent=99 // pred_fallthru
          _
      $region100: #{tpu_custom_call.1} parent=5 // pred_fallthru
        _
    $region6: #{tpu_custom_call.1} parent=1 // loop_footer
      %s31 = sadd.s32 1, %s27
    $region7: #{tpu_custom_call.1} parent=1 // loop_footer_branch
      %26 = sbr.rel target = $region3
    $region8: #{tpu_custom_call.1} parent=1 // loop_exit
      _
    %1260 = vsyncpa [#allocation3], 1
    %s1261 = scalar_lea.sflag [#allocation3], 1
    %1262 = vsyncpa %s1261, 1
    %1263 = vsyncpa [#allocation6], 1
    %1264 = vsyncpa [#allocation9], 1
    %1265 = vsyncpa [#allocation4], 1
    %s1266 = scalar_lea.sflag [#allocation4], 1
    %1267 = vsyncpa %s1266, 1

</llo_original>
